<compile_context>
chip_gen: v7x
topology: tpu7x:2x2x1
jax: 0.10.0
libtpu: 0.0.40
codegen_flags: <defaults>
</compile_context>

<pallas_src>
import math

import jax
import jax.numpy as jnp
from jax.experimental import pallas as pl
from jax.experimental.pallas import tpu as pltpu


# ---------------------------------------------------------------------------
# Kernel 1: fused feature projection (tiled matmul, two outputs)
#   z     = x @ W      [N, H*F]
#   el_er = x @ W_lr   [N, 2H]    (attention vectors folded into columns)
# ---------------------------------------------------------------------------
def _proj_kernel(x_ref, w_ref, wlr_ref, z_ref, s_ref, accz_ref, accs_ref):
    k = pl.program_id(1)

    @pl.when(k == 0)
    def _():
        accz_ref[...] = jnp.zeros_like(accz_ref)
        accs_ref[...] = jnp.zeros_like(accs_ref)

    x = x_ref[...]
    accz_ref[...] += jnp.dot(x, w_ref[...], preferred_element_type=jnp.float32)
    accs_ref[...] += jnp.dot(x, wlr_ref[...], preferred_element_type=jnp.float32)

    @pl.when(k == pl.num_programs(1) - 1)
    def _():
        z_ref[...] = accz_ref[...]
        s_ref[...] = accs_ref[...]


# ---------------------------------------------------------------------------
# Kernel 2: flash-style masked edge softmax + aggregation, all heads batched.
#   z_ref   : (TS, H*F)  projected src features (f32, cast to bf16 for MXU)
#   elT_ref : (H, TS)    per-head src logits (lane-major)
#   er_ref  : (TD, H)    per-head dst logits
#   adj_ref : (TD, TS)   int8 dst-major adjacency tile (adj_t[v,u] = 1 iff u->v)
#   b_ref   : (1, H*F)   bias
#   o_ref   : (TD, H*F)  output tile (lane-dense, written on last src tile)
#   m/l/acc : VMEM scratch running max / denom / accumulator
# ---------------------------------------------------------------------------
def _make_attn_kernel(num_heads, out_feats, negative_slope):
    H, F = num_heads, out_feats
    NEG = -1e30  # finite "masked" value; requires every dst to have >=1 in-edge
                 # (self-loops), matching the module's allow_zero_in_degree check.

    def kernel(z_ref, elT_ref, er_ref, adj_ref, b_ref, o_ref,
               m_ref, l_ref, acc_ref):
        s_idx = pl.program_id(1)

        @pl.when(s_idx == 0)
        def _():
            m_ref[...] = jnp.full_like(m_ref, NEG)
            l_ref[...] = jnp.zeros_like(l_ref)
            acc_ref[...] = jnp.zeros_like(acc_ref)

        # Additive edge mask, computed once per tile and shared by all heads.
        adj_f = adj_ref[...].astype(jnp.float32)
        mask = jnp.where(adj_f > 0.5, 0.0, NEG)

        z_bf = z_ref[...].astype(jnp.bfloat16)              # (TS, H*F)

        for h in range(H):                                   # static unroll
            el = elT_ref[h:h + 1, :]                         # (1, TS)
            er = er_ref[:, h:h + 1]                          # (TD, 1)
            e = er + el                                      # (TD, TS)
            e = jnp.where(e > 0, e, negative_slope * e)      # LeakyReLU
            e = e + mask                                     # mask non-edges

            m_prev = m_ref[:, h:h + 1]                       # (TD, 1)
            m_new = jnp.maximum(m_prev, jnp.max(e, axis=-1, keepdims=True))
            alpha = jnp.exp(m_prev - m_new)                  # (TD, 1)
            p = jnp.exp(e - m_new)                           # (TD, TS)
            l_ref[:, h:h + 1] = alpha * l_ref[:, h:h + 1] + \
                jnp.sum(p, axis=-1, keepdims=True)
            m_ref[:, h:h + 1] = m_new

            cols = slice(h * F, (h + 1) * F)
            pv = jnp.dot(p.astype(jnp.bfloat16), z_bf[:, cols],
                         preferred_element_type=jnp.float32)  # (TD, F)
            acc_ref[:, cols] = alpha * acc_ref[:, cols] + pv

        @pl.when(s_idx == pl.num_programs(1) - 1)
        def _():
            b = b_ref[...]                                   # (1, H*F)
            for h in range(H):
                cols = slice(h * F, (h + 1) * F)
                inv = pl.reciprocal(l_ref[:, h:h + 1], approx=True)  # (TD, 1)
                o_ref[:, cols] = acc_ref[:, cols] * inv + b[:, cols]

    return kernel


# ---------------------------------------------------------------------------
# Wrapper
# ---------------------------------------------------------------------------
def gat_conv(feat, adj_t, W, attn_l, attn_r, bias, *, num_heads, out_feats,
             negative_slope=0.2, tile_m=128, tile_dst=128, tile_src=128):
    """GATConv forward.

    feat   : [N, Din] f32 node features
    adj_t  : [N, N] int8 dst-major adjacency (adj_t[v,u]=1 iff edge u->v).
             Precomputed once per graph (do not transpose/cast per call).
    W      : [Din, H*F] fc weight (transposed vs torch's [H*F, Din])
    attn_l, attn_r : [H, F] attention vectors
    bias   : [H*F]
    """
    N, din = feat.shape
    H, F = num_heads, out_feats
    HF = H * F
    assert W.shape == (din, HF)
    assert adj_t.shape == (N, N)

    tile_m = min(tile_m, N)
    tile_dst = min(tile_dst, N)
    tile_src = min(tile_src, N)
    assert N % tile_m == 0 and N % tile_dst == 0 and N % tile_src == 0, \
        "N must be a multiple of the tile sizes"
    tile_k = 512 if (din % 512 == 0) else din  # single K step for small Din

    # Fold attention vectors into extra projection columns:
    #   el = feat @ W_l with W_l[d,h] = sum_f W[d, h*F+f] * attn_l[h,f]
    W3 = W.reshape(din, H, F)
    W_lr = jnp.concatenate([jnp.einsum("dhf,hf->dh", W3, attn_l),
                            jnp.einsum("dhf,hf->dh", W3, attn_r)],
                           axis=1).astype(jnp.float32)        # [Din, 2H]

    # --- projection: z = feat @ W, el_er = feat @ W_lr (tiled) -------------
    z, el_er = pl.pallas_call(
        _proj_kernel,
        out_shape=(jax.ShapeDtypeStruct((N, HF), jnp.float32),
                   jax.ShapeDtypeStruct((N, 2 * H), jnp.float32)),
        grid=(N // tile_m, din // tile_k),
        in_specs=[pl.BlockSpec((tile_m, tile_k), lambda m, k: (m, k)),
                  pl.BlockSpec((tile_k, HF), lambda m, k: (k, 0)),
                  pl.BlockSpec((tile_k, 2 * H), lambda m, k: (k, 0))],
        out_specs=(pl.BlockSpec((tile_m, HF), lambda m, k: (m, 0)),
                   pl.BlockSpec((tile_m, 2 * H), lambda m, k: (m, 0))),
        scratch_shapes=[pltpu.VMEM((tile_m, HF), jnp.float32),
                        pltpu.VMEM((tile_m, 2 * H), jnp.float32)],
        compiler_params=pltpu.CompilerParams(
            dimension_semantics=("parallel", "arbitrary")),
    )(feat, W, W_lr)

    elT = el_er[:, :H].T             # [H, N]  src logits, lane-major per head
    er = el_er[:, H:]                # [N, H]  dst logits
    bias2d = bias.reshape(1, HF).astype(jnp.float32)

    # --- flash-style attention + aggregation --------------------------------
    kernel = _make_attn_kernel(H, F, negative_slope)
    out = pl.pallas_call(
        kernel,
        out_shape=jax.ShapeDtypeStruct((N, HF), jnp.float32),
        grid=(N // tile_dst, N // tile_src),
        in_specs=[pl.BlockSpec((tile_src, HF), lambda d, s: (s, 0)),        # z
                  pl.BlockSpec((H, tile_src), lambda d, s: (0, s)),         # elT
                  pl.BlockSpec((tile_dst, H), lambda d, s: (d, 0)),         # er
                  pl.BlockSpec((tile_dst, tile_src), lambda d, s: (d, s)),  # adj_t
                  pl.BlockSpec((1, HF), lambda d, s: (0, 0))],              # bias
        out_specs=pl.BlockSpec((tile_dst, HF), lambda d, s: (d, 0)),
        scratch_shapes=[pltpu.VMEM((tile_dst, H), jnp.float32),    # running max
                        pltpu.VMEM((tile_dst, H), jnp.float32),    # running denom
                        pltpu.VMEM((tile_dst, HF), jnp.float32)],  # accumulator
        compiler_params=pltpu.CompilerParams(
            dimension_semantics=("parallel", "arbitrary"),
            vmem_limit_bytes=32 * 1024 * 1024),
    )(z, elT, er, adj_t, bias2d)

    return out  # [N, H*F]   (concat_out=True layout)


# ---------------------------------------------------------------------------
# Pure-JAX reference (mirrors the PyTorch/DGL math)
# ---------------------------------------------------------------------------
def gat_conv_ref(feat, adj, W, attn_l, attn_r, bias, *, num_heads, out_feats):
    N = feat.shape[0]
    zh = (feat @ W).reshape(N, num_heads, out_feats)               # [N, H, F]
    el = jnp.sum(zh * attn_l[None], axis=-1)                       # [N, H]
    er = jnp.sum(zh * attn_r[None], axis=-1)                       # [N, H]
    e = el[:, None, :] + er[None, :, :]                            # [Nsrc, Ndst, H]
    e = jnp.where(e > 0, e, 0.2 * e)
    e = jnp.where(adj[:, :, None] > 0, e, -1e30)
    a = jax.nn.softmax(e, axis=0)                                  # softmax over src
    out = jnp.einsum('uvh,uhf->vhf', a, zh)                        # [Ndst, H, F]
    out = out + bias.reshape(1, num_heads, out_feats)
    return out.reshape(N, num_heads * out_feats)


if __name__ == "__main__":
    # Small deterministic problem: N=256 nodes, Din=64, F=16, H=8  (H*F = 128
    # -> lane-dense output block; 2x2 tile grid exercises the flash pipeline).
    N, in_feats, out_feats, num_heads = 256, 64, 16, 8
    HF = num_heads * out_feats

    key = jax.random.PRNGKey(0)
    k_w, k_al, k_ar, k_feat, k_adj = jax.random.split(key, 5)

    gain = math.sqrt(2.0)  # calculate_gain('relu')
    std_fc = gain * math.sqrt(2.0 / (in_feats + HF))
    W = (std_fc * jax.random.normal(k_w, (in_feats, HF))).astype(jnp.float32)
    std_attn = gain * math.sqrt(2.0 / (HF + out_feats))
    attn_l = (std_attn * jax.random.normal(k_al, (num_heads, out_feats))).astype(jnp.float32)
    attn_r = (std_attn * jax.random.normal(k_ar, (num_heads, out_feats))).astype(jnp.float32)
    bias = jnp.zeros((HF,), jnp.float32)  # constant_(0)

    feat = jax.random.normal(k_feat, (N, in_feats), dtype=jnp.float32)
    # random sparse graph + self-loops (no zero in-degree)
    adj = (jax.random.uniform(k_adj, (N, N)) < 0.05).astype(jnp.float32)
    adj = jnp.maximum(adj, jnp.eye(N, dtype=jnp.float32))

    # Graph structure is static: precompute the dst-major int8 mask ONCE.
    adj_t = adj.T.astype(jnp.int8)

    out = gat_conv(feat, adj_t, W, attn_l, attn_r, bias,
                   num_heads=num_heads, out_feats=out_feats)
    out = jax.block_until_ready(out)

    ref = gat_conv_ref(feat, adj, W, attn_l, attn_r, bias,
                       num_heads=num_heads, out_feats=out_feats)
    assert out.shape == (N, HF)
    # bf16 MXU inputs for the aggregation matmul -> ~1e-3-level absolute error
    # vs the pure-f32 reference, so tolerance is loosened accordingly.
    max_err = float(jnp.max(jnp.abs(out - ref)))
    assert jnp.allclose(out, ref, atol=3e-2, rtol=3e-2), \
        f"mismatch vs reference (max abs err {max_err})"

    print("KERNEL_OK")
</pallas_src>

<mosaic_0001>
module attributes {stable_mosaic.version = 11 : i64} {
  func.func @_proj_kernel(%arg0: i32, %arg1: i32, %arg2: memref<128x64xf32, #tpu.memory_space<vmem>>, %arg3: memref<64x128xf32, #tpu.memory_space<vmem>>, %arg4: memref<64x16xf32, #tpu.memory_space<vmem>>, %arg5: memref<128x128xf32, #tpu.memory_space<vmem>>, %arg6: memref<128x16xf32, #tpu.memory_space<vmem>>, %arg7: memref<128x128xf32, #tpu.memory_space<vmem>>, %arg8: memref<128x16xf32, #tpu.memory_space<vmem>>) attributes {dimension_semantics = [#tpu.dimension_semantics<parallel>, #tpu.dimension_semantics<arbitrary>], iteration_bounds = array<i64: 2, 1>, scalar_prefetch = 0 : i64, scratch_operands = 2 : i64, tpu.core_type = #tpu.core_type<tc>, window_params = [{transform_indices = @transform_0, window_bounds = array<i64: 128, 64>}, {transform_indices = @transform_1, window_bounds = array<i64: 64, 128>}, {transform_indices = @transform_2, window_bounds = array<i64: 64, 16>}, {transform_indices = @transform_3, window_bounds = array<i64: 128, 128>}, {transform_indices = @transform_4, window_bounds = array<i64: 128, 16>}]} {
    %c0_i32 = arith.constant 0 : i32
    %0 = arith.cmpi eq, %arg1, %c0_i32 : i32
    %1 = arith.extui %0 : i1 to i32
    %c0_i32_0 = arith.constant 0 : i32
    %2 = arith.cmpi ne, %1, %c0_i32_0 : i32
    scf.if %2 {
      %cst_17 = arith.constant 0.000000e+00 : f32
      %17 = vector.broadcast %cst_17 : f32 to vector<128x128xf32>
      %c0_18 = arith.constant 0 : index
      %c0_19 = arith.constant 0 : index
      %18 = vector.load %arg7[%c0_18, %c0_19] : memref<128x128xf32, #tpu.memory_space<vmem>>, vector<128x128xf32>
      tpu.vector_store %arg7[%c0_18, %c0_19], %17 {strides = array<i32>} : memref<128x128xf32, #tpu.memory_space<vmem>>, vector<128x128xf32>,
      %cst_20 = arith.constant 0.000000e+00 : f32
      %19 = vector.broadcast %cst_20 : f32 to vector<128x16xf32>
      %c0_21 = arith.constant 0 : index
      %c0_22 = arith.constant 0 : index
      %20 = vector.load %arg8[%c0_21, %c0_22] : memref<128x16xf32, #tpu.memory_space<vmem>>, vector<128x16xf32>
      tpu.vector_store %arg8[%c0_21, %c0_22], %19 {strides = array<i32>} : memref<128x16xf32, #tpu.memory_space<vmem>>, vector<128x16xf32>,
    } else {
    }
    %c0 = arith.constant 0 : index
    %c0_1 = arith.constant 0 : index
    %3 = vector.load %arg2[%c0, %c0_1] : memref<128x64xf32, #tpu.memory_space<vmem>>, vector<128x64xf32>
    %c0_2 = arith.constant 0 : index
    %c0_3 = arith.constant 0 : index
    %4 = vector.load %arg7[%c0_2, %c0_3] : memref<128x128xf32, #tpu.memory_space<vmem>>, vector<128x128xf32>
    %c0_4 = arith.constant 0 : index
    %c0_5 = arith.constant 0 : index
    %5 = vector.load %arg3[%c0_4, %c0_5] : memref<64x128xf32, #tpu.memory_space<vmem>>, vector<64x128xf32>
    %cst = arith.constant dense<0.000000e+00> : vector<128x128xf32>
    %6 = tpu.matmul %3, %5, %cst {dimension_numbers = #tpu.dot_dimension_numbers<[1], [0], [0], [1], [0, 0, 1, 1], [], []>} : vector<128x64xf32>, vector<64x128xf32>, vector<128x128xf32> -> vector<128x128xf32>
    %7 = arith.addf %4, %6 : vector<128x128xf32>
    %c0_6 = arith.constant 0 : index
    %c0_7 = arith.constant 0 : index
    %8 = vector.load %arg7[%c0_6, %c0_7] : memref<128x128xf32, #tpu.memory_space<vmem>>, vector<128x128xf32>
    tpu.vector_store %arg7[%c0_6, %c0_7], %7 {strides = array<i32>} : memref<128x128xf32, #tpu.memory_space<vmem>>, vector<128x128xf32>,
    %c0_8 = arith.constant 0 : index
    %c0_9 = arith.constant 0 : index
    %9 = vector.load %arg8[%c0_8, %c0_9] : memref<128x16xf32, #tpu.memory_space<vmem>>, vector<128x16xf32>
    %c0_10 = arith.constant 0 : index
    %c0_11 = arith.constant 0 : index
    %10 = vector.load %arg4[%c0_10, %c0_11] : memref<64x16xf32, #tpu.memory_space<vmem>>, vector<64x16xf32>
    %cst_12 = arith.constant dense<0.000000e+00> : vector<128x16xf32>
    %11 = tpu.matmul %3, %10, %cst_12 {dimension_numbers = #tpu.dot_dimension_numbers<[1], [0], [0], [1], [0, 0, 1, 1], [], []>} : vector<128x64xf32>, vector<64x16xf32>, vector<128x16xf32> -> vector<128x16xf32>
    %12 = arith.addf %9, %11 : vector<128x16xf32>
    %c0_13 = arith.constant 0 : index
    %c0_14 = arith.constant 0 : index
    %13 = vector.load %arg8[%c0_13, %c0_14] : memref<128x16xf32, #tpu.memory_space<vmem>>, vector<128x16xf32>
    tpu.vector_store %arg8[%c0_13, %c0_14], %12 {strides = array<i32>} : memref<128x16xf32, #tpu.memory_space<vmem>>, vector<128x16xf32>,
    %c0_i32_15 = arith.constant 0 : i32
    %14 = arith.cmpi eq, %arg1, %c0_i32_15 : i32
    %15 = arith.extui %14 : i1 to i32
    %c0_i32_16 = arith.constant 0 : i32
    %16 = arith.cmpi ne, %15, %c0_i32_16 : i32
    scf.if %16 {
      %c0_17 = arith.constant 0 : index
      %c0_18 = arith.constant 0 : index
      %17 = vector.load %arg7[%c0_17, %c0_18] : memref<128x128xf32, #tpu.memory_space<vmem>>, vector<128x128xf32>
      %c0_19 = arith.constant 0 : index
      %c0_20 = arith.constant 0 : index
      %18 = vector.load %arg5[%c0_19, %c0_20] : memref<128x128xf32, #tpu.memory_space<vmem>>, vector<128x128xf32>
      tpu.vector_store %arg5[%c0_19, %c0_20], %17 {strides = array<i32>} : memref<128x128xf32, #tpu.memory_space<vmem>>, vector<128x128xf32>,
      %c0_21 = arith.constant 0 : index
      %c0_22 = arith.constant 0 : index
      %19 = vector.load %arg8[%c0_21, %c0_22] : memref<128x16xf32, #tpu.memory_space<vmem>>, vector<128x16xf32>
      %c0_23 = arith.constant 0 : index
      %c0_24 = arith.constant 0 : index
      %20 = vector.load %arg6[%c0_23, %c0_24] : memref<128x16xf32, #tpu.memory_space<vmem>>, vector<128x16xf32>
      tpu.vector_store %arg6[%c0_23, %c0_24], %19 {strides = array<i32>} : memref<128x16xf32, #tpu.memory_space<vmem>>, vector<128x16xf32>,
    } else {
    }
    return
  }
  func.func @transform_0(%arg0: i32, %arg1: i32) -> (i32, i32) {
    %c0_i32 = arith.constant 0 : i32
    return %arg0, %arg1 : i32, i32
  }
  func.func @transform_1(%arg0: i32, %arg1: i32) -> (i32, i32) {
    %c0_i32 = arith.constant 0 : i32
    %c0_i32_0 = arith.constant 0 : i32
    return %arg1, %c0_i32 : i32, i32
  }
  func.func @transform_2(%arg0: i32, %arg1: i32) -> (i32, i32) {
    %c0_i32 = arith.constant 0 : i32
    %c0_i32_0 = arith.constant 0 : i32
    return %arg1, %c0_i32 : i32, i32
  }
  func.func @transform_3(%arg0: i32, %arg1: i32) -> (i32, i32) {
    %c0_i32 = arith.constant 0 : i32
    %c0_i32_0 = arith.constant 0 : i32
    return %arg0, %c0_i32 : i32, i32
  }
  func.func @transform_4(%arg0: i32, %arg1: i32) -> (i32, i32) {
    %c0_i32 = arith.constant 0 : i32
    %c0_i32_0 = arith.constant 0 : i32
    return %arg0, %c0_i32 : i32, i32
  }
}

</mosaic_0001>

<llo_original>
// kernel: tpu_custom_call.1
$region0: #{tpu_custom_call.1}
  #allocation0 [shape = 'u32[]', space=smem, size = 0x4, offset = 0x4, fixed_abs, tag = 'smem constant byte address 0x4 - core index']
  #allocation1 [shape = 'u32[144,128]{1,0:T(1,128)}', space=vmem, size = 0x12000, scoped, tag = 'internal scratch']
  #allocation2 [shape = 'f32[128,128]{1,0:T(8,128)}', space=vmem, size = 0x10000, scoped, tag = 'scratch operand']
  #allocation3 [shape = 'f32[128,16]{1,0:T(8,128)}', space=vmem, size = 0x10000, scoped, tag = 'scratch operand']
  %s0 = inlined_call_operand.vmem [shape: f32[256,64], index: 0, kind: input, shape index: {}]
  %s1 = inlined_call_operand.vmem [shape: f32[64,128], index: 1, kind: input, shape index: {}]
  %s2 = inlined_call_operand.vmem [shape: f32[64,16], index: 2, kind: input, shape index: {}]
  %s3 = inlined_call_operand.hbm [shape: f32[256,128], index: 3, kind: output, shape index: {0}]
  %s4 = inlined_call_operand.vmem [shape: f32[256,16], index: 4, kind: output, shape index: {1}]
  %5 = xla_tuple %s3, %s4
  %s6 = sld [smem:[#allocation0]]
  $region61: #{tpu_custom_call.1} parent=0
    _
  %s8 = ssub.s32 1, %s6
  %s9 = scalar_select 0, %s8, %s6
  $region1: #{tpu_custom_call.1} parent=0
    #allocation4 [shape = 'u8[131072]{0}', space=vmem, size = 0x20000, scoped, tag = 'output window, operand 0']
    #allocation5 [shape = 's32[2]{0}', space=sflag, size = 0x8, scoped, tag = 'scoped memory for tpu_custom_call.1']
    %10 = vsyncpa [#allocation5], 0
    %s11 = scalar_lea.sflag [#allocation5], 1
    %12 = vsyncpa %s11, 0
    loop: start=0, step=1, limit=4
    $region2: #{tpu_custom_call.1} parent=1 // loop_pre_header
      _
    $region3: #{tpu_custom_call.1} parent=1 // loop_header
      %s14 = sphi 0, %s18
      %p15 = scmp.ge.s32.totalorder %s14, 4
      %s21 = sphi 0, %s33
      %s22 = sphi 0, %s29
      %s23 = sphi 0, %s21
      %s24 = sphi 0, %s22
      %s25 = sphi 0, %s23
      %s26 = sphi 0, %s24
      %s38 = sphi 0, %s40
      %s41 = sphi 0, %s38
      %s42 = sphi 0, %s41
      %s58 = sphi 0, %s42
      %s64 = sphi 0, %s66
      %s67 = sphi 0, %s64
      %s68 = sphi 0, %s67
      %s84 = sphi 0, %s68
      %s90 = sphi 0, %s92
      %s93 = sphi 0, %s90
      %s94 = sphi 0, %s93
      %s110 = sphi 0, %s94
      %s116 = sphi 0, %s118
      %s119 = sphi 0, %s116
      %s120 = sphi 0, %s119
      %s136 = sphi 0, %s120
      %s142 = sphi 0, %s144
      %s145 = sphi 0, %s142
      %s146 = sphi 0, %s145
      %s162 = sphi 0, %s146
    $region4: #{tpu_custom_call.1} parent=1 // loop_header_branch
      %17 = sbr.rel (%p15) target = $region8
    $region5: #{tpu_custom_call.1} parent=1 // loop_body
      %s19 = ssub.s32 %s14, 1
      %s20 = ssub.s32 %s14, 2
      %s27 = sadd.s32 1, %s22
      %p28 = scmp.ge.s32.totalorder %s27, 1
      %s29 = scalar_select %p28, 0, %s27
      %s30 = sadd.s32 1, %s21
      %s31 = scalar_select %p28, %s30, %s21
      %p32 = scmp.ge.s32.totalorder %s31, 2
      %s33 = scalar_select %p32, 0, %s31
      %s34 = ssub.s32 %s21, %s33
      %s35 = ssub.s32 %s22, %s29
      %s36 = sor.u32 %s34, %s35
      %p37 = scmp.eq.s32.totalorder %s36, 0
      %s39 = sadd.s32 %s38, 1
      %s40 = scalar_select %p37, %s38, %s39
      %p43 = pneg %p37
      %p44 = scmp.eq.s32.totalorder %s14, 1
      %p45 = por %p43, %p44
      %p46 = scmp.ne.s32.totalorder %s38, %s41
      %p47 = scmp.eq.s32.totalorder %s14, 0
      %p48 = por %p46, %p47
      %p49 = scmp.ne.s32.totalorder %s38, %s41
      %p50 = scmp.eq.s32.totalorder %s19, 1
      %p51 = por %p49, %p50
      %p52 = scmp.ne.s32.totalorder %s41, %s42
      %p53 = scmp.eq.s32.totalorder %s19, 0
      %p54 = por %p52, %p53
      %p55 = scmp.ne.s32.totalorder %s41, %s42
      %p56 = scmp.eq.s32.totalorder %s20, 1
      %p57 = por %p55, %p56
      %p59 = scmp.ne.s32.totalorder %s42, %s58
      %p60 = scmp.eq.s32.totalorder %s20, 0
      %p61 = por %p59, %p60
      %s62 = ssub.s32 %s22, %s29
      %p63 = scmp.eq.s32.totalorder %s62, 0
      %s65 = sadd.s32 %s64, 1
      %s66 = scalar_select %p63, %s64, %s65
      %p69 = pneg %p63
      %p70 = scmp.eq.s32.totalorder %s14, 1
      %p71 = por %p69, %p70
      %p72 = scmp.ne.s32.totalorder %s64, %s67
      %p73 = scmp.eq.s32.totalorder %s14, 0
      %p74 = por %p72, %p73
      %p75 = scmp.ne.s32.totalorder %s64, %s67
      %p76 = scmp.eq.s32.totalorder %s19, 1
      %p77 = por %p75, %p76
      %p78 = scmp.ne.s32.totalorder %s67, %s68
      %p79 = scmp.eq.s32.totalorder %s19, 0
      %p80 = por %p78, %p79
      %p81 = scmp.ne.s32.totalorder %s67, %s68
      %p82 = scmp.eq.s32.totalorder %s20, 1
      %p83 = por %p81, %p82
      %p85 = scmp.ne.s32.totalorder %s68, %s84
      %p86 = scmp.eq.s32.totalorder %s20, 0
      %p87 = por %p85, %p86
      %s88 = ssub.s32 %s22, %s29
      %p89 = scmp.eq.s32.totalorder %s88, 0
      %s91 = sadd.s32 %s90, 1
      %s92 = scalar_select %p89, %s90, %s91
      %p95 = pneg %p89
      %p96 = scmp.eq.s32.totalorder %s14, 1
      %p97 = por %p95, %p96
      %p98 = scmp.ne.s32.totalorder %s90, %s93
      %p99 = scmp.eq.s32.totalorder %s14, 0
      %p100 = por %p98, %p99
      %p101 = scmp.ne.s32.totalorder %s90, %s93
      %p102 = scmp.eq.s32.totalorder %s19, 1
      %p103 = por %p101, %p102
      %p104 = scmp.ne.s32.totalorder %s93, %s94
      %p105 = scmp.eq.s32.totalorder %s19, 0
      %p106 = por %p104, %p105
      %p107 = scmp.ne.s32.totalorder %s93, %s94
      %p108 = scmp.eq.s32.totalorder %s20, 1
      %p109 = por %p107, %p108
      %p111 = scmp.ne.s32.totalorder %s94, %s110
      %p112 = scmp.eq.s32.totalorder %s20, 0
      %p113 = por %p111, %p112
      %s114 = ssub.s32 %s21, %s33
      %p115 = scmp.eq.s32.totalorder %s114, 0
      %s117 = sadd.s32 %s116, 1
      %s118 = scalar_select %p115, %s116, %s117
      %p121 = pneg %p115
      %p122 = scmp.eq.s32.totalorder %s14, 1
      %p123 = por %p121, %p122
      %p124 = scmp.ne.s32.totalorder %s116, %s119
      %p125 = scmp.eq.s32.totalorder %s14, 0
      %p126 = por %p124, %p125
      %p127 = scmp.ne.s32.totalorder %s116, %s119
      %p128 = scmp.eq.s32.totalorder %s19, 1
      %p129 = por %p127, %p128
      %p130 = scmp.ne.s32.totalorder %s119, %s120
      %p131 = scmp.eq.s32.totalorder %s19, 0
      %p132 = por %p130, %p131
      %p133 = scmp.ne.s32.totalorder %s119, %s120
      %p134 = scmp.eq.s32.totalorder %s20, 1
      %p135 = por %p133, %p134
      %p137 = scmp.ne.s32.totalorder %s120, %s136
      %p138 = scmp.eq.s32.totalorder %s20, 0
      %p139 = por %p137, %p138
      %s140 = ssub.s32 %s21, %s33
      %p141 = scmp.eq.s32.totalorder %s140, 0
      %s143 = sadd.s32 %s142, 1
      %s144 = scalar_select %p141, %s142, %s143
      %p147 = pneg %p141
      %p148 = scmp.eq.s32.totalorder %s14, 1
      %p149 = por %p147, %p148
      %p150 = scmp.ne.s32.totalorder %s142, %s145
      %p151 = scmp.eq.s32.totalorder %s14, 0
      %p152 = por %p150, %p151
      %p153 = scmp.ne.s32.totalorder %s142, %s145
      %p154 = scmp.eq.s32.totalorder %s19, 1
      %p155 = por %p153, %p154
      %p156 = scmp.ne.s32.totalorder %s145, %s146
      %p157 = scmp.eq.s32.totalorder %s19, 0
      %p158 = por %p156, %p157
      %p159 = scmp.ne.s32.totalorder %s145, %s146
      %p160 = scmp.eq.s32.totalorder %s20, 1
      %p161 = por %p159, %p160
      %p163 = scmp.ne.s32.totalorder %s146, %s162
      %p164 = scmp.eq.s32.totalorder %s20, 0
      %p165 = por %p163, %p164
      %p166 = scmp.le.s32.totalorder 1, %s14
      %p167 = scmp.lt.s32.totalorder %s14, 3
      %p168 = pnand %p166, %p167
      %p169 = pneg %p168
      // Predicated region
      $region9: #{tpu_custom_call.1} parent=5 // pred_check
        _
      $region10: #{tpu_custom_call.1} parent=5 // pred_check_branch
        %171 = sbr.rel (%p168) target = $region12
      $region11: #{tpu_custom_call.1} parent=5 // pred_region
        %s172 = ssub.s32 %s14, 1
        // Predicated region
        $region13: #{tpu_custom_call.1} parent=11 // pred_check
          %p173 = pneg %p80
        $region14: #{tpu_custom_call.1} parent=11 // pred_check_branch
          %175 = sbr.rel (%p173) target = $region16
        $region15: #{tpu_custom_call.1} parent=11 // pred_region
          %s176 = smul.u32 8, %s24
          %p177 = scmp.lt.s32.totalorder %s176, 7
          %s178 = scalar_select %p177, %s176, 7
          %s179 = smul.addr %s178, 8
          %s180 = scalar_lea.vmem %s1, %s179
          %s181 = smul.u32 8, %s24
        $region16: #{tpu_custom_call.1} parent=11 // pred_fallthru
          _
        // Predicated region
        $region17: #{tpu_custom_call.1} parent=11 // pred_check
          %p182 = pneg %p106
        $region18: #{tpu_custom_call.1} parent=11 // pred_check_branch
          %184 = sbr.rel (%p182) target = $region20
        $region19: #{tpu_custom_call.1} parent=11 // pred_region
          %s185 = smul.u32 8, %s24
          %p186 = scmp.lt.s32.totalorder %s185, 7
          %s187 = scalar_select %p186, %s185, 7
          %s188 = smul.addr %s187, 8
          %s189 = scalar_lea.vmem %s2, %s188
          %s190 = smul.u32 8, %s24
        $region20: #{tpu_custom_call.1} parent=11 // pred_fallthru
          _
      $region12: #{tpu_custom_call.1} parent=5 // pred_fallthru
        _
      %p191 = scmp.lt.s32.totalorder %s14, 2
      // Predicated region
      $region21: #{tpu_custom_call.1} parent=5 // pred_check
        %p192 = pneg %p191
      $region22: #{tpu_custom_call.1} parent=5 // pred_check_branch
        %194 = sbr.rel (%p192) target = $region24
      $region23: #{tpu_custom_call.1} parent=5 // pred_region
        // Predicated region
        $region25: #{tpu_custom_call.1} parent=23 // pred_check
          %p195 = pneg %p48
        $region26: #{tpu_custom_call.1} parent=23 // pred_check_branch
          %197 = sbr.rel (%p195) target = $region28
        $region27: #{tpu_custom_call.1} parent=23 // pred_region
          %s198 = smul.u32 16, %s21
          %p199 = scmp.lt.s32.totalorder %s198, 31
          %s200 = scalar_select %p199, %s198, 31
          %p201 = scmp.lt.s32.totalorder %s22, 0
          %s202 = scalar_select %p201, %s22, 0
          %s203 = sadd.s32 %s202, %s200
          %s204 = smul.addr %s203, 8
          %s205 = scalar_lea.vmem %s0, %s204
          %s206 = smul.u32 16, %s21
        $region28: #{tpu_custom_call.1} parent=23 // pred_fallthru
          _
      $region24: #{tpu_custom_call.1} parent=5 // pred_fallthru
        _
      %p207 = scmp.le.s32.totalorder 1, %s14
      %p208 = scmp.lt.s32.totalorder %s14, 3
      %p209 = pnand %p207, %p208
      %p210 = pneg %p209
      // Predicated region
      $region29: #{tpu_custom_call.1} parent=5 // pred_check
        _
      $region30: #{tpu_custom_call.1} parent=5 // pred_check_branch
        %212 = sbr.rel (%p209) target = $region32
      $region31: #{tpu_custom_call.1} parent=5 // pred_region
        %s213 = ssub.s32 %s14, 1
        %s214 = smul.u32 16, %s23
        %p215 = scmp.lt.s32.totalorder %s214, 31
        %s216 = scalar_select %p215, %s214, 31
        %p217 = scmp.lt.s32.totalorder %s24, 0
        %s218 = scalar_select %p217, %s24, 0
        %s219 = sadd.s32 %s218, %s216
        %s220 = smul.addr %s219, 8
        %s221 = scalar_lea.vmem %s0, %s220
        %p222 = pneg %p54
        %p223 = pneg %p51
        %s224 = smul.u32 8, %s24
        %p225 = scmp.lt.s32.totalorder %s224, 7
        %s226 = scalar_select %p225, %s224, 7
        %s227 = smul.addr %s226, 8
        %s228 = scalar_lea.vmem %s1, %s227
        %p229 = pneg %p80
        %p230 = pneg %p77
        %s231 = smul.u32 8, %s24
        %p232 = scmp.lt.s32.totalorder %s231, 7
        %s233 = scalar_select %p232, %s231, 7
        %s234 = smul.addr %s233, 8
        %s235 = scalar_lea.vmem %s2, %s234
        %p236 = pneg %p106
        %p237 = pneg %p103
        %p238 = pneg %p132
        %p239 = pneg %p129
        %s240 = sand.u32 %s119, 1
        %s241 = scalar_lea.sflag [#allocation5], %s240
        %s242 = sand.u32 %s119, 1
        %s243 = smul.addr %s242, 128
        %s244 = scalar_lea.vmem [#allocation4], %s243
        %p245 = pneg %p158
        %p246 = pneg %p155
        %s247 = smul.u32 16, %s23
        %p248 = scmp.lt.s32.totalorder %s247, 31
        %s249 = scalar_select %p248, %s247, 31
        %s250 = smul.addr %s249, 8
        %s251 = scalar_lea.vmem %s4, %s250
        %s252 = smul.u32 16, %s23
        %p253 = scmp.lt.s32.totalorder %s252, 31
        %s254 = scalar_select %p253, %s252, 31
        %p255 = scmp.lt.s32.totalorder %s24, 0
        %s256 = scalar_select %p255, %s24, 0
        %s257 = sadd.s32 %s256, %s254
        %s258 = smul.addr %s257, 8
        %s259 = scalar_lea.vmem %s0, %s258
        %s260 = smul.u32 16, %s23
        %s261 = smul.u32 8, %s24
        %p262 = scmp.lt.s32.totalorder %s261, 7
        %s263 = scalar_select %p262, %s261, 7
        %s264 = smul.addr %s263, 8
        %s265 = scalar_lea.vmem %s1, %s264
        %s266 = smul.u32 8, %s24
        %s267 = smul.u32 8, %s24
        %p268 = scmp.lt.s32.totalorder %s267, 7
        %s269 = scalar_select %p268, %s267, 7
        %s270 = smul.addr %s269, 8
        %s271 = scalar_lea.vmem %s2, %s270
        %s272 = smul.u32 8, %s24
        %s273 = smul.u32 16, %s23
        %s274 = smul.u32 16, %s23
        %p275 = scmp.lt.s32.totalorder %s274, 31
        %s276 = scalar_select %p275, %s274, 31
        %s277 = smul.addr %s276, 8
        %s278 = scalar_lea.vmem %s4, %s277
        %s279 = smul.u32 16, %s23
        %p280 = scmp.eq.s32.totalorder %s24, 0
        // Predicated region
        $region33: #{tpu_custom_call.1} parent=31 // pred_check
          %p281 = pneg %p280
        $region34: #{tpu_custom_call.1} parent=31 // pred_check_branch
          %283 = sbr.rel (%p281) target = $region36
        $region35: #{tpu_custom_call.1} parent=31 // pred_region
          %284 = vst [vmem:[#allocation2] sm:$0xff] 0.0
          %285 = vst [vmem:[#allocation2 + $0x8] sm:$0xff] 0.0
          %286 = vst [vmem:[#allocation2 + $0x10] sm:$0xff] 0.0
          %287 = vst [vmem:[#allocation2 + $0x18] sm:$0xff] 0.0
          %288 = vst [vmem:[#allocation2 + $0x20] sm:$0xff] 0.0
          %289 = vst [vmem:[#allocation2 + $0x28] sm:$0xff] 0.0
          %290 = vst [vmem:[#allocation2 + $0x30] sm:$0xff] 0.0
          %291 = vst [vmem:[#allocation2 + $0x38] sm:$0xff] 0.0
          %292 = vst [vmem:[#allocation2 + $0x40] sm:$0xff] 0.0
          %293 = vst [vmem:[#allocation2 + $0x48] sm:$0xff] 0.0
          %294 = vst [vmem:[#allocation2 + $0x50] sm:$0xff] 0.0
          %295 = vst [vmem:[#allocation2 + $0x58] sm:$0xff] 0.0
          %296 = vst [vmem:[#allocation2 + $0x60] sm:$0xff] 0.0
          %297 = vst [vmem:[#allocation2 + $0x68] sm:$0xff] 0.0
          %298 = vst [vmem:[#allocation2 + $0x70] sm:$0xff] 0.0
          %299 = vst [vmem:[#allocation2 + $0x78] sm:$0xff] 0.0
          %vm300 = vcmask 130048
          %301 = vst.msk [vmem:[#allocation3] sm:$0xff] %vm300, 0.0
          %302 = vst.msk [vmem:[#allocation3 + $0x8] sm:$0xff] %vm300, 0.0
          %303 = vst.msk [vmem:[#allocation3 + $0x10] sm:$0xff] %vm300, 0.0
          %304 = vst.msk [vmem:[#allocation3 + $0x18] sm:$0xff] %vm300, 0.0
          %305 = vst.msk [vmem:[#allocation3 + $0x20] sm:$0xff] %vm300, 0.0
          %306 = vst.msk [vmem:[#allocation3 + $0x28] sm:$0xff] %vm300, 0.0
          %307 = vst.msk [vmem:[#allocation3 + $0x30] sm:$0xff] %vm300, 0.0
          %308 = vst.msk [vmem:[#allocation3 + $0x38] sm:$0xff] %vm300, 0.0
          %309 = vst.msk [vmem:[#allocation3 + $0x40] sm:$0xff] %vm300, 0.0
          %310 = vst.msk [vmem:[#allocation3 + $0x48] sm:$0xff] %vm300, 0.0
          %311 = vst.msk [vmem:[#allocation3 + $0x50] sm:$0xff] %vm300, 0.0
          %312 = vst.msk [vmem:[#allocation3 + $0x58] sm:$0xff] %vm300, 0.0
          %313 = vst.msk [vmem:[#allocation3 + $0x60] sm:$0xff] %vm300, 0.0
          %314 = vst.msk [vmem:[#allocation3 + $0x68] sm:$0xff] %vm300, 0.0
          %315 = vst.msk [vmem:[#allocation3 + $0x70] sm:$0xff] %vm300, 0.0
          %316 = vst.msk [vmem:[#allocation3 + $0x78] sm:$0xff] %vm300, 0.0
        $region36: #{tpu_custom_call.1} parent=31 // pred_fallthru
          _
        %v317 = vld [vmem:[%s259] sm:$0xff]
        %v318 = vld [vmem:[%s259 + $0x8] sm:$0xff]
        %v319 = vld [vmem:[%s259 + $0x10] sm:$0xff]
        %v320 = vld [vmem:[%s259 + $0x18] sm:$0xff]
        %v321 = vld [vmem:[%s259 + $0x20] sm:$0xff]
        %v322 = vld [vmem:[%s259 + $0x28] sm:$0xff]
        %v323 = vld [vmem:[%s259 + $0x30] sm:$0xff]
        %v324 = vld [vmem:[%s259 + $0x38] sm:$0xff]
        %v325 = vld [vmem:[%s259 + $0x40] sm:$0xff]
        %v326 = vld [vmem:[%s259 + $0x48] sm:$0xff]
        %v327 = vld [vmem:[%s259 + $0x50] sm:$0xff]
        %v328 = vld [vmem:[%s259 + $0x58] sm:$0xff]
        %v329 = vld [vmem:[%s259 + $0x60] sm:$0xff]
        %v330 = vld [vmem:[%s259 + $0x68] sm:$0xff]
        %v331 = vld [vmem:[%s259 + $0x70] sm:$0xff]
        %v332 = vld [vmem:[%s259 + $0x78] sm:$0xff]
        %v333 = vld [vmem:[#allocation2] sm:$0xff]
        %v334 = vld [vmem:[#allocation2 + $0x8] sm:$0xff]
        %v335 = vld [vmem:[#allocation2 + $0x10] sm:$0xff]
        %v336 = vld [vmem:[#allocation2 + $0x18] sm:$0xff]
        %v337 = vld [vmem:[#allocation2 + $0x20] sm:$0xff]
        %v338 = vld [vmem:[#allocation2 + $0x28] sm:$0xff]
        %v339 = vld [vmem:[#allocation2 + $0x30] sm:$0xff]
        %v340 = vld [vmem:[#allocation2 + $0x38] sm:$0xff]
        %v341 = vld [vmem:[#allocation2 + $0x40] sm:$0xff]
        %v342 = vld [vmem:[#allocation2 + $0x48] sm:$0xff]
        %v343 = vld [vmem:[#allocation2 + $0x50] sm:$0xff]
        %v344 = vld [vmem:[#allocation2 + $0x58] sm:$0xff]
        %v345 = vld [vmem:[#allocation2 + $0x60] sm:$0xff]
        %v346 = vld [vmem:[#allocation2 + $0x68] sm:$0xff]
        %v347 = vld [vmem:[#allocation2 + $0x70] sm:$0xff]
        %v348 = vld [vmem:[#allocation2 + $0x78] sm:$0xff]
        %v349 = vld [vmem:[%s265] sm:$0xff]
        %v350 = vld [vmem:[%s265 + $0x8] sm:$0xff]
        %v351 = vld [vmem:[%s265 + $0x10] sm:$0xff]
        %v352 = vld [vmem:[%s265 + $0x18] sm:$0xff]
        %v353 = vld [vmem:[%s265 + $0x20] sm:$0xff]
        %v354 = vld [vmem:[%s265 + $0x28] sm:$0xff]
        %v355 = vld [vmem:[%s265 + $0x30] sm:$0xff]
        %v356 = vld [vmem:[%s265 + $0x38] sm:$0xff]
        %vm357 = vcmask 523264
        %v359 = vsel %vm357, %v317, 0
        %v362 = vsel %vm357, %v318, 0
        %v365 = vsel %vm357, %v319, 0
        %v368 = vsel %vm357, %v320, 0
        %v371 = vsel %vm357, %v321, 0
        %v374 = vsel %vm357, %v322, 0
        %v377 = vsel %vm357, %v323, 0
        %v380 = vsel %vm357, %v324, 0
        %v383 = vsel %vm357, %v325, 0
        %v386 = vsel %vm357, %v326, 0
        %v389 = vsel %vm357, %v327, 0
        %v392 = vsel %vm357, %v328, 0
        %v395 = vsel %vm357, %v329, 0
        %v398 = vsel %vm357, %v330, 0
        %v401 = vsel %vm357, %v331, 0
        %v404 = vsel %vm357, %v332, 0
        %406 = vmatprep.subr.mxu0 0.0
        %407 = vmatpush1.msra.mxu0 %v349
        %408 = vmatprep.subr.mxu0 0.0
        %409 = vmatpush1.msra.mxu0 %v350
        %410 = vmatprep.subr.mxu0 0.0
        %411 = vmatpush1.msra.mxu0 %v351
        %412 = vmatprep.subr.mxu0 0.0
        %413 = vmatpush1.msra.mxu0 %v352
        %414 = vmatprep.subr.mxu0 0.0
        %415 = vmatpush1.msra.mxu0 %v353
        %416 = vmatprep.subr.mxu0 0.0
        %417 = vmatpush1.msra.mxu0 %v354
        %418 = vmatprep.subr.mxu0 0.0
        %419 = vmatpush1.msra.mxu0 %v355
        %420 = vmatprep.subr.mxu0 0.0
        %421 = vmatpush1.msra.mxu0 %v356
        %422 = vmatprep.subr.mxu0 0.0
        %423 = vmatpush1.msra.mxu0 0.0
        %424 = vmatprep.subr.mxu0 0.0
        %425 = vmatpush1.msra.mxu0 0.0
        %426 = vmatprep.subr.mxu0 0.0
        %427 = vmatpush1.msra.mxu0 0.0
        %428 = vmatprep.subr.mxu0 0.0
        %429 = vmatpush1.msra.mxu0 0.0
        %430 = vmatprep.subr.mxu0 0.0
        %431 = vmatpush1.msra.mxu0 0.0
        %432 = vmatprep.subr.mxu0 0.0
        %433 = vmatpush1.msra.mxu0 0.0
        %434 = vmatprep.subr.mxu0 0.0
        %435 = vmatpush1.msra.mxu0 0.0
        %436 = vmatprep.subr.mxu0 0.0
        %437 = vmatpush1.msra.mxu0 0.0
        %438 = vmatprep.subr.mxu0 0.0
        %439 = vmatpush1.msra.mxu0 0.0
        %440 = vmatprep.subr.mxu0 0.0
        %441 = vmatpush1.msra.mxu0 0.0
        %442 = vmatprep.subr.mxu0 0.0
        %443 = vmatpush1.msra.mxu0 0.0
        %444 = vmatprep.subr.mxu0 0.0
        %445 = vmatpush1.msra.mxu0 0.0
        %446 = vmatprep.subr.mxu0 0.0
        %447 = vmatpush1.msra.mxu0 0.0
        %448 = vmatprep.subr.mxu0 0.0
        %449 = vmatpush1.msra.mxu0 0.0
        %450 = vmatprep.subr.mxu0 0.0
        %451 = vmatpush1.msra.mxu0 0.0
        %452 = vmatprep.subr.mxu0 0.0
        %453 = vmatpush1.msra.mxu0 0.0
        %454 = vmatprep.subr.mxu0 0.0
        %455 = vmatpush1.msra.mxu0 0.0
        %456 = vmatprep.subr.mxu0 0.0
        %457 = vmatpush1.msra.mxu0 0.0
        %458 = vmatprep.subr.mxu0 0.0
        %459 = vmatpush1.msra.mxu0 0.0
        %460 = vmatprep.subr.mxu0 0.0
        %461 = vmatpush1.msra.mxu0 0.0
        %462 = vmatprep.subr.mxu0 0.0
        %463 = vmatpush1.msra.mxu0 0.0
        %464 = vmatprep.subr.mxu0 0.0
        %465 = vmatpush1.msra.mxu0 0.0
        %466 = vmatprep.subr.mxu0 0.0
        %467 = vmatpush1.msra.mxu0 0.0
        %468 = vmatprep.subr.mxu0 0.0
        %469 = vmatpush1.msra.mxu0 0.0
        %470 = vmatprep.mubr.f32.mxu0 0.0
        %471 = vmatmul.mubr.f32.gmra.mrb[0].mxu0 %v359
        %v472 = vpop.f32.mrb[0].mxu0
        %v473 = vadd.f32 0.0, %v472
        %v474 = vpop.f32.mrb[0].mxu0
        %475 = vmatprep.mubr.f32.mxu0 0.0
        %476 = vmatmul.mubr.f32.gmra.mrb[0].mxu0 %v362
        %v477 = vpop.f32.mrb[0].mxu0
        %v478 = vadd.f32 0.0, %v477
        %v479 = vpop.f32.mrb[0].mxu0
        %480 = vmatprep.mubr.f32.mxu0 0.0
        %481 = vmatmul.mubr.f32.gmra.mrb[0].mxu0 %v365
        %v482 = vpop.f32.mrb[0].mxu0
        %v483 = vadd.f32 0.0, %v482
        %v484 = vpop.f32.mrb[0].mxu0
        %485 = vmatprep.mubr.f32.mxu0 0.0
        %486 = vmatmul.mubr.f32.gmra.mrb[0].mxu0 %v368
        %v487 = vpop.f32.mrb[0].mxu0
        %v488 = vadd.f32 0.0, %v487
        %v489 = vpop.f32.mrb[0].mxu0
        %490 = vmatprep.mubr.f32.mxu0 0.0
        %491 = vmatmul.mubr.f32.gmra.mrb[0].mxu0 %v371
        %v492 = vpop.f32.mrb[0].mxu0
        %v493 = vadd.f32 0.0, %v492
        %v494 = vpop.f32.mrb[0].mxu0
        %495 = vmatprep.mubr.f32.mxu0 0.0
        %496 = vmatmul.mubr.f32.gmra.mrb[0].mxu0 %v374
        %v497 = vpop.f32.mrb[0].mxu0
        %v498 = vadd.f32 0.0, %v497
        %v499 = vpop.f32.mrb[0].mxu0
        %500 = vmatprep.mubr.f32.mxu0 0.0
        %501 = vmatmul.mubr.f32.gmra.mrb[0].mxu0 %v377
        %v502 = vpop.f32.mrb[0].mxu0
        %v503 = vadd.f32 0.0, %v502
        %v504 = vpop.f32.mrb[0].mxu0
        %505 = vmatprep.mubr.f32.mxu0 0.0
        %506 = vmatmul.mubr.f32.gmra.mrb[0].mxu0 %v380
        %v507 = vpop.f32.mrb[0].mxu0
        %v508 = vadd.f32 0.0, %v507
        %v509 = vpop.f32.mrb[0].mxu0
        %510 = vmatprep.mubr.f32.mxu0 0.0
        %511 = vmatmul.mubr.f32.gmra.mrb[0].mxu0 %v383
        %v512 = vpop.f32.mrb[0].mxu0
        %v513 = vadd.f32 0.0, %v512
        %v514 = vpop.f32.mrb[0].mxu0
        %515 = vmatprep.mubr.f32.mxu0 0.0
        %516 = vmatmul.mubr.f32.gmra.mrb[0].mxu0 %v386
        %v517 = vpop.f32.mrb[0].mxu0
        %v518 = vadd.f32 0.0, %v517
        %v519 = vpop.f32.mrb[0].mxu0
        %520 = vmatprep.mubr.f32.mxu0 0.0
        %521 = vmatmul.mubr.f32.gmra.mrb[0].mxu0 %v389
        %v522 = vpop.f32.mrb[0].mxu0
        %v523 = vadd.f32 0.0, %v522
        %v524 = vpop.f32.mrb[0].mxu0
        %525 = vmatprep.mubr.f32.mxu0 0.0
        %526 = vmatmul.mubr.f32.gmra.mrb[0].mxu0 %v392
        %v527 = vpop.f32.mrb[0].mxu0
        %v528 = vadd.f32 0.0, %v527
        %v529 = vpop.f32.mrb[0].mxu0
        %530 = vmatprep.mubr.f32.mxu0 0.0
        %531 = vmatmul.mubr.f32.gmra.mrb[0].mxu0 %v395
        %v532 = vpop.f32.mrb[0].mxu0
        %v533 = vadd.f32 0.0, %v532
        %v534 = vpop.f32.mrb[0].mxu0
        %535 = vmatprep.mubr.f32.mxu0 0.0
        %536 = vmatmul.mubr.f32.gmra.mrb[0].mxu0 %v398
        %v537 = vpop.f32.mrb[0].mxu0
        %v538 = vadd.f32 0.0, %v537
        %v539 = vpop.f32.mrb[0].mxu0
        %540 = vmatprep.mubr.f32.mxu0 0.0
        %541 = vmatmul.mubr.f32.gmra.mrb[0].mxu0 %v401
        %v542 = vpop.f32.mrb[0].mxu0
        %v543 = vadd.f32 0.0, %v542
        %v544 = vpop.f32.mrb[0].mxu0
        %545 = vmatprep.mubr.f32.mxu0 0.0
        %546 = vmatmul.mubr.f32.gmra.mrb[0].mxu0 %v404
        %v547 = vpop.f32.mrb[0].mxu0
        %v548 = vadd.f32 0.0, %v547
        %v549 = vpop.f32.mrb[0].mxu0
        %550 = vdwg.mxu0
        %v551 = vadd.f32 %v333, %v473
        %v552 = vadd.f32 %v334, %v478
        %v553 = vadd.f32 %v335, %v483
        %v554 = vadd.f32 %v336, %v488
        %v555 = vadd.f32 %v337, %v493
        %v556 = vadd.f32 %v338, %v498
        %v557 = vadd.f32 %v339, %v503
        %v558 = vadd.f32 %v340, %v508
        %v559 = vadd.f32 %v341, %v513
        %v560 = vadd.f32 %v342, %v518
        %v561 = vadd.f32 %v343, %v523
        %v562 = vadd.f32 %v344, %v528
        %v563 = vadd.f32 %v345, %v533
        %v564 = vadd.f32 %v346, %v538
        %v565 = vadd.f32 %v347, %v543
        %v566 = vadd.f32 %v348, %v548
        %567 = vst [vmem:[#allocation2] sm:$0xff] %v551
        %568 = vst [vmem:[#allocation2 + $0x8] sm:$0xff] %v552
        %569 = vst [vmem:[#allocation2 + $0x10] sm:$0xff] %v553
        %570 = vst [vmem:[#allocation2 + $0x18] sm:$0xff] %v554
        %571 = vst [vmem:[#allocation2 + $0x20] sm:$0xff] %v555
        %572 = vst [vmem:[#allocation2 + $0x28] sm:$0xff] %v556
        %573 = vst [vmem:[#allocation2 + $0x30] sm:$0xff] %v557
        %574 = vst [vmem:[#allocation2 + $0x38] sm:$0xff] %v558
        %575 = vst [vmem:[#allocation2 + $0x40] sm:$0xff] %v559
        %576 = vst [vmem:[#allocation2 + $0x48] sm:$0xff] %v560
        %577 = vst [vmem:[#allocation2 + $0x50] sm:$0xff] %v561
        %578 = vst [vmem:[#allocation2 + $0x58] sm:$0xff] %v562
        %579 = vst [vmem:[#allocation2 + $0x60] sm:$0xff] %v563
        %580 = vst [vmem:[#allocation2 + $0x68] sm:$0xff] %v564
        %581 = vst [vmem:[#allocation2 + $0x70] sm:$0xff] %v565
        %582 = vst [vmem:[#allocation2 + $0x78] sm:$0xff] %v566
        %v583 = vld [vmem:[#allocation3] sm:$0xff]
        %v584 = vld [vmem:[#allocation3 + $0x8] sm:$0xff]
        %v585 = vld [vmem:[#allocation3 + $0x10] sm:$0xff]
        %v586 = vld [vmem:[#allocation3 + $0x18] sm:$0xff]
        %v587 = vld [vmem:[#allocation3 + $0x20] sm:$0xff]
        %v588 = vld [vmem:[#allocation3 + $0x28] sm:$0xff]
        %v589 = vld [vmem:[#allocation3 + $0x30] sm:$0xff]
        %v590 = vld [vmem:[#allocation3 + $0x38] sm:$0xff]
        %v591 = vld [vmem:[#allocation3 + $0x40] sm:$0xff]
        %v592 = vld [vmem:[#allocation3 + $0x48] sm:$0xff]
        %v593 = vld [vmem:[#allocation3 + $0x50] sm:$0xff]
        %v594 = vld [vmem:[#allocation3 + $0x58] sm:$0xff]
        %v595 = vld [vmem:[#allocation3 + $0x60] sm:$0xff]
        %v596 = vld [vmem:[#allocation3 + $0x68] sm:$0xff]
        %v597 = vld [vmem:[#allocation3 + $0x70] sm:$0xff]
        %v598 = vld [vmem:[#allocation3 + $0x78] sm:$0xff]
        %v599 = vld [vmem:[%s271] sm:$0xff]
        %v600 = vld [vmem:[%s271 + $0x8] sm:$0xff]
        %v601 = vld [vmem:[%s271 + $0x10] sm:$0xff]
        %v602 = vld [vmem:[%s271 + $0x18] sm:$0xff]
        %v603 = vld [vmem:[%s271 + $0x20] sm:$0xff]
        %v604 = vld [vmem:[%s271 + $0x28] sm:$0xff]
        %v605 = vld [vmem:[%s271 + $0x30] sm:$0xff]
        %v606 = vld [vmem:[%s271 + $0x38] sm:$0xff]
        %607 = vmatprep.subr.mxu0 0.0
        %608 = vmatpush1.msra.mxu0 %v599
        %609 = vmatprep.subr.mxu0 0.0
        %610 = vmatpush1.msra.mxu0 %v600
        %611 = vmatprep.subr.mxu0 0.0
        %612 = vmatpush1.msra.mxu0 %v601
        %613 = vmatprep.subr.mxu0 0.0
        %614 = vmatpush1.msra.mxu0 %v602
        %615 = vmatprep.subr.mxu0 0.0
        %616 = vmatpush1.msra.mxu0 %v603
        %617 = vmatprep.subr.mxu0 0.0
        %618 = vmatpush1.msra.mxu0 %v604
        %619 = vmatprep.subr.mxu0 0.0
        %620 = vmatpush1.msra.mxu0 %v605
        %621 = vmatprep.subr.mxu0 0.0
        %622 = vmatpush1.msra.mxu0 %v606
        %623 = vmatprep.subr.mxu0 0.0
        %624 = vmatpush1.msra.mxu0 0.0
        %625 = vmatprep.subr.mxu0 0.0
        %626 = vmatpush1.msra.mxu0 0.0
        %627 = vmatprep.subr.mxu0 0.0
        %628 = vmatpush1.msra.mxu0 0.0
        %629 = vmatprep.subr.mxu0 0.0
        %630 = vmatpush1.msra.mxu0 0.0
        %631 = vmatprep.subr.mxu0 0.0
        %632 = vmatpush1.msra.mxu0 0.0
        %633 = vmatprep.subr.mxu0 0.0
        %634 = vmatpush1.msra.mxu0 0.0
        %635 = vmatprep.subr.mxu0 0.0
        %636 = vmatpush1.msra.mxu0 0.0
        %637 = vmatprep.subr.mxu0 0.0
        %638 = vmatpush1.msra.mxu0 0.0
        %639 = vmatprep.subr.mxu0 0.0
        %640 = vmatpush1.msra.mxu0 0.0
        %641 = vmatprep.subr.mxu0 0.0
        %642 = vmatpush1.msra.mxu0 0.0
        %643 = vmatprep.subr.mxu0 0.0
        %644 = vmatpush1.msra.mxu0 0.0
        %645 = vmatprep.subr.mxu0 0.0
        %646 = vmatpush1.msra.mxu0 0.0
        %647 = vmatprep.subr.mxu0 0.0
        %648 = vmatpush1.msra.mxu0 0.0
        %649 = vmatprep.subr.mxu0 0.0
        %650 = vmatpush1.msra.mxu0 0.0
        %651 = vmatprep.subr.mxu0 0.0
        %652 = vmatpush1.msra.mxu0 0.0
        %653 = vmatprep.subr.mxu0 0.0
        %654 = vmatpush1.msra.mxu0 0.0
        %655 = vmatprep.subr.mxu0 0.0
        %656 = vmatpush1.msra.mxu0 0.0
        %657 = vmatprep.subr.mxu0 0.0
        %658 = vmatpush1.msra.mxu0 0.0
        %659 = vmatprep.subr.mxu0 0.0
        %660 = vmatpush1.msra.mxu0 0.0
        %661 = vmatprep.subr.mxu0 0.0
        %662 = vmatpush1.msra.mxu0 0.0
        %663 = vmatprep.subr.mxu0 0.0
        %664 = vmatpush1.msra.mxu0 0.0
        %665 = vmatprep.subr.mxu0 0.0
        %666 = vmatpush1.msra.mxu0 0.0
        %667 = vmatprep.subr.mxu0 0.0
        %668 = vmatpush1.msra.mxu0 0.0
        %669 = vmatprep.subr.mxu0 0.0
        %670 = vmatpush1.msra.mxu0 0.0
        %671 = vmatprep.mubr.f32.mxu0 0.0
        %672 = vmatmul.mubr.f32.gmra.mrb[0].mxu0 %v359
        %v673 = vpop.f32.mrb[0].mxu0
        %v674 = vadd.f32 0.0, %v673
        %v675 = vpop.f32.mrb[0].mxu0
        %676 = vmatprep.mubr.f32.mxu0 0.0
        %677 = vmatmul.mubr.f32.gmra.mrb[0].mxu0 %v362
        %v678 = vpop.f32.mrb[0].mxu0
        %v679 = vadd.f32 0.0, %v678
        %v680 = vpop.f32.mrb[0].mxu0
        %681 = vmatprep.mubr.f32.mxu0 0.0
        %682 = vmatmul.mubr.f32.gmra.mrb[0].mxu0 %v365
        %v683 = vpop.f32.mrb[0].mxu0
        %v684 = vadd.f32 0.0, %v683
        %v685 = vpop.f32.mrb[0].mxu0
        %686 = vmatprep.mubr.f32.mxu0 0.0
        %687 = vmatmul.mubr.f32.gmra.mrb[0].mxu0 %v368
        %v688 = vpop.f32.mrb[0].mxu0
        %v689 = vadd.f32 0.0, %v688
        %v690 = vpop.f32.mrb[0].mxu0
        %691 = vmatprep.mubr.f32.mxu0 0.0
        %692 = vmatmul.mubr.f32.gmra.mrb[0].mxu0 %v371
        %v693 = vpop.f32.mrb[0].mxu0
        %v694 = vadd.f32 0.0, %v693
        %v695 = vpop.f32.mrb[0].mxu0
        %696 = vmatprep.mubr.f32.mxu0 0.0
        %697 = vmatmul.mubr.f32.gmra.mrb[0].mxu0 %v374
        %v698 = vpop.f32.mrb[0].mxu0
        %v699 = vadd.f32 0.0, %v698
        %v700 = vpop.f32.mrb[0].mxu0
        %701 = vmatprep.mubr.f32.mxu0 0.0
        %702 = vmatmul.mubr.f32.gmra.mrb[0].mxu0 %v377
        %v703 = vpop.f32.mrb[0].mxu0
        %v704 = vadd.f32 0.0, %v703
        %v705 = vpop.f32.mrb[0].mxu0
        %706 = vmatprep.mubr.f32.mxu0 0.0
        %707 = vmatmul.mubr.f32.gmra.mrb[0].mxu0 %v380
        %v708 = vpop.f32.mrb[0].mxu0
        %v709 = vadd.f32 0.0, %v708
        %v710 = vpop.f32.mrb[0].mxu0
        %711 = vmatprep.mubr.f32.mxu0 0.0
        %712 = vmatmul.mubr.f32.gmra.mrb[0].mxu0 %v383
        %v713 = vpop.f32.mrb[0].mxu0
        %v714 = vadd.f32 0.0, %v713
        %v715 = vpop.f32.mrb[0].mxu0
        %716 = vmatprep.mubr.f32.mxu0 0.0
        %717 = vmatmul.mubr.f32.gmra.mrb[0].mxu0 %v386
        %v718 = vpop.f32.mrb[0].mxu0
        %v719 = vadd.f32 0.0, %v718
        %v720 = vpop.f32.mrb[0].mxu0
        %721 = vmatprep.mubr.f32.mxu0 0.0
        %722 = vmatmul.mubr.f32.gmra.mrb[0].mxu0 %v389
        %v723 = vpop.f32.mrb[0].mxu0
        %v724 = vadd.f32 0.0, %v723
        %v725 = vpop.f32.mrb[0].mxu0
        %726 = vmatprep.mubr.f32.mxu0 0.0
        %727 = vmatmul.mubr.f32.gmra.mrb[0].mxu0 %v392
        %v728 = vpop.f32.mrb[0].mxu0
        %v729 = vadd.f32 0.0, %v728
        %v730 = vpop.f32.mrb[0].mxu0
        %731 = vmatprep.mubr.f32.mxu0 0.0
        %732 = vmatmul.mubr.f32.gmra.mrb[0].mxu0 %v395
        %v733 = vpop.f32.mrb[0].mxu0
        %v734 = vadd.f32 0.0, %v733
        %v735 = vpop.f32.mrb[0].mxu0
        %736 = vmatprep.mubr.f32.mxu0 0.0
        %737 = vmatmul.mubr.f32.gmra.mrb[0].mxu0 %v398
        %v738 = vpop.f32.mrb[0].mxu0
        %v739 = vadd.f32 0.0, %v738
        %v740 = vpop.f32.mrb[0].mxu0
        %741 = vmatprep.mubr.f32.mxu0 0.0
        %742 = vmatmul.mubr.f32.gmra.mrb[0].mxu0 %v401
        %v743 = vpop.f32.mrb[0].mxu0
        %v744 = vadd.f32 0.0, %v743
        %v745 = vpop.f32.mrb[0].mxu0
        %746 = vmatprep.mubr.f32.mxu0 0.0
        %747 = vmatmul.mubr.f32.gmra.mrb[0].mxu0 %v404
        %v748 = vpop.f32.mrb[0].mxu0
        %v749 = vadd.f32 0.0, %v748
        %v750 = vpop.f32.mrb[0].mxu0
        %751 = vdwg.mxu0
        %v752 = vadd.f32 %v583, %v674
        %v753 = vadd.f32 %v584, %v679
        %v754 = vadd.f32 %v585, %v684
        %v755 = vadd.f32 %v586, %v689
        %v756 = vadd.f32 %v587, %v694
        %v757 = vadd.f32 %v588, %v699
        %v758 = vadd.f32 %v589, %v704
        %v759 = vadd.f32 %v590, %v709
        %v760 = vadd.f32 %v591, %v714
        %v761 = vadd.f32 %v592, %v719
        %v762 = vadd.f32 %v593, %v724
        %v763 = vadd.f32 %v594, %v729
        %v764 = vadd.f32 %v595, %v734
        %v765 = vadd.f32 %v596, %v739
        %v766 = vadd.f32 %v597, %v744
        %v767 = vadd.f32 %v598, %v749
        %vm768 = vcmask 130048
        %769 = vst.msk [vmem:[#allocation3] sm:$0xff] %vm768, %v752
        %770 = vst.msk [vmem:[#allocation3 + $0x8] sm:$0xff] %vm768, %v753
        %771 = vst.msk [vmem:[#allocation3 + $0x10] sm:$0xff] %vm768, %v754
        %772 = vst.msk [vmem:[#allocation3 + $0x18] sm:$0xff] %vm768, %v755
        %773 = vst.msk [vmem:[#allocation3 + $0x20] sm:$0xff] %vm768, %v756
        %774 = vst.msk [vmem:[#allocation3 + $0x28] sm:$0xff] %vm768, %v757
        %775 = vst.msk [vmem:[#allocation3 + $0x30] sm:$0xff] %vm768, %v758
        %776 = vst.msk [vmem:[#allocation3 + $0x38] sm:$0xff] %vm768, %v759
        %777 = vst.msk [vmem:[#allocation3 + $0x40] sm:$0xff] %vm768, %v760
        %778 = vst.msk [vmem:[#allocation3 + $0x48] sm:$0xff] %vm768, %v761
        %779 = vst.msk [vmem:[#allocation3 + $0x50] sm:$0xff] %vm768, %v762
        %780 = vst.msk [vmem:[#allocation3 + $0x58] sm:$0xff] %vm768, %v763
        %781 = vst.msk [vmem:[#allocation3 + $0x60] sm:$0xff] %vm768, %v764
        %782 = vst.msk [vmem:[#allocation3 + $0x68] sm:$0xff] %vm768, %v765
        %783 = vst.msk [vmem:[#allocation3 + $0x70] sm:$0xff] %vm768, %v766
        %784 = vst.msk [vmem:[#allocation3 + $0x78] sm:$0xff] %vm768, %v767
        // Predicated region
        $region37: #{tpu_custom_call.1} parent=31 // pred_check
          %p785 = pneg %p280
        $region38: #{tpu_custom_call.1} parent=31 // pred_check_branch
          %787 = sbr.rel (%p785) target = $region40
        $region39: #{tpu_custom_call.1} parent=31 // pred_region
          %v788 = vld [vmem:[#allocation2] sm:$0xff]
          %v789 = vld [vmem:[#allocation2 + $0x8] sm:$0xff]
          %v790 = vld [vmem:[#allocation2 + $0x10] sm:$0xff]
          %v791 = vld [vmem:[#allocation2 + $0x18] sm:$0xff]
          %v792 = vld [vmem:[#allocation2 + $0x20] sm:$0xff]
          %v793 = vld [vmem:[#allocation2 + $0x28] sm:$0xff]
          %v794 = vld [vmem:[#allocation2 + $0x30] sm:$0xff]
          %v795 = vld [vmem:[#allocation2 + $0x38] sm:$0xff]
          %v796 = vld [vmem:[#allocation2 + $0x40] sm:$0xff]
          %v797 = vld [vmem:[#allocation2 + $0x48] sm:$0xff]
          %v798 = vld [vmem:[#allocation2 + $0x50] sm:$0xff]
          %v799 = vld [vmem:[#allocation2 + $0x58] sm:$0xff]
          %v800 = vld [vmem:[#allocation2 + $0x60] sm:$0xff]
          %v801 = vld [vmem:[#allocation2 + $0x68] sm:$0xff]
          %v802 = vld [vmem:[#allocation2 + $0x70] sm:$0xff]
          %v803 = vld [vmem:[#allocation2 + $0x78] sm:$0xff]
          %804 = vst [vmem:[%s244] sm:$0xff] %v788
          %805 = vst [vmem:[%s244 + $0x8] sm:$0xff] %v789
          %806 = vst [vmem:[%s244 + $0x10] sm:$0xff] %v790
          %807 = vst [vmem:[%s244 + $0x18] sm:$0xff] %v791
          %808 = vst [vmem:[%s244 + $0x20] sm:$0xff] %v792
          %809 = vst [vmem:[%s244 + $0x28] sm:$0xff] %v793
          %810 = vst [vmem:[%s244 + $0x30] sm:$0xff] %v794
          %811 = vst [vmem:[%s244 + $0x38] sm:$0xff] %v795
          %812 = vst [vmem:[%s244 + $0x40] sm:$0xff] %v796
          %813 = vst [vmem:[%s244 + $0x48] sm:$0xff] %v797
          %814 = vst [vmem:[%s244 + $0x50] sm:$0xff] %v798
          %815 = vst [vmem:[%s244 + $0x58] sm:$0xff] %v799
          %816 = vst [vmem:[%s244 + $0x60] sm:$0xff] %v800
          %817 = vst [vmem:[%s244 + $0x68] sm:$0xff] %v801
          %818 = vst [vmem:[%s244 + $0x70] sm:$0xff] %v802
          %819 = vst [vmem:[%s244 + $0x78] sm:$0xff] %v803
          %v820 = vld [vmem:[#allocation3] sm:$0xff]
          %v821 = vld [vmem:[#allocation3 + $0x8] sm:$0xff]
          %v822 = vld [vmem:[#allocation3 + $0x10] sm:$0xff]
          %v823 = vld [vmem:[#allocation3 + $0x18] sm:$0xff]
          %v824 = vld [vmem:[#allocation3 + $0x20] sm:$0xff]
          %v825 = vld [vmem:[#allocation3 + $0x28] sm:$0xff]
          %v826 = vld [vmem:[#allocation3 + $0x30] sm:$0xff]
          %v827 = vld [vmem:[#allocation3 + $0x38] sm:$0xff]
          %v828 = vld [vmem:[#allocation3 + $0x40] sm:$0xff]
          %v829 = vld [vmem:[#allocation3 + $0x48] sm:$0xff]
          %v830 = vld [vmem:[#allocation3 + $0x50] sm:$0xff]
          %v831 = vld [vmem:[#allocation3 + $0x58] sm:$0xff]
          %v832 = vld [vmem:[#allocation3 + $0x60] sm:$0xff]
          %v833 = vld [vmem:[#allocation3 + $0x68] sm:$0xff]
          %v834 = vld [vmem:[#allocation3 + $0x70] sm:$0xff]
          %v835 = vld [vmem:[#allocation3 + $0x78] sm:$0xff]
          %836 = vst.msk [vmem:[%s278] sm:$0xff] %vm768, %v820
          %837 = vst.msk [vmem:[%s278 + $0x8] sm:$0xff] %vm768, %v821
          %838 = vst.msk [vmem:[%s278 + $0x10] sm:$0xff] %vm768, %v822
          %839 = vst.msk [vmem:[%s278 + $0x18] sm:$0xff] %vm768, %v823
          %840 = vst.msk [vmem:[%s278 + $0x20] sm:$0xff] %vm768, %v824
          %841 = vst.msk [vmem:[%s278 + $0x28] sm:$0xff] %vm768, %v825
          %842 = vst.msk [vmem:[%s278 + $0x30] sm:$0xff] %vm768, %v826
          %843 = vst.msk [vmem:[%s278 + $0x38] sm:$0xff] %vm768, %v827
          %844 = vst.msk [vmem:[%s278 + $0x40] sm:$0xff] %vm768, %v828
          %845 = vst.msk [vmem:[%s278 + $0x48] sm:$0xff] %vm768, %v829
          %846 = vst.msk [vmem:[%s278 + $0x50] sm:$0xff] %vm768, %v830
          %847 = vst.msk [vmem:[%s278 + $0x58] sm:$0xff] %vm768, %v831
          %848 = vst.msk [vmem:[%s278 + $0x60] sm:$0xff] %vm768, %v832
          %849 = vst.msk [vmem:[%s278 + $0x68] sm:$0xff] %vm768, %v833
          %850 = vst.msk [vmem:[%s278 + $0x70] sm:$0xff] %vm768, %v834
          %851 = vst.msk [vmem:[%s278 + $0x78] sm:$0xff] %vm768, %v835
        $region40: #{tpu_custom_call.1} parent=31 // pred_fallthru
          _
        %s852 = sand.u32 %s119, 1
        %s853 = scalar_lea.sflag [#allocation5], %s852
        %s854 = sand.u32 %s119, 1
        %s855 = smul.addr %s854, 128
        %s856 = scalar_lea.vmem [#allocation4], %s855
        %s857 = smul.u32 16, %s23
        %p858 = scmp.lt.s32.totalorder %s857, 31
        %s859 = scalar_select %p858, %s857, 31
        %s860 = smul.addr %s859, 8
        %s861 = scalar_lea.vmem %s4, %s860
        // Predicated region
        $region41: #{tpu_custom_call.1} parent=31 // pred_check
          %p862 = pneg %p129
        $region42: #{tpu_custom_call.1} parent=31 // pred_check_branch
          %864 = sbr.rel (%p862) target = $region44
        $region43: #{tpu_custom_call.1} parent=31 // pred_region
          %s865 = smul.u32 16, %s23
          %s867 = ssub.s32 2048, 2048
          %868 = vsyncadd %s853, %s867
          %s869 = smul.addr %s865, 128
          %s870 = scalar_lea.hbm %s3, %s869
          %s871 = sshll.u32 %s856, 4
          %s872 = int_to_ptr.vmem [resolvable:$true] %s871
          %877 = dma.vmem_to_hbm [thread:$0]  %s872, 2048, %s870, %s853, 128, 128, 8
        $region44: #{tpu_custom_call.1} parent=31 // pred_fallthru
          _
        // Predicated region
        $region45: #{tpu_custom_call.1} parent=31 // pred_check
          %p878 = pneg %p155
        $region46: #{tpu_custom_call.1} parent=31 // pred_check_branch
          %880 = sbr.rel (%p878) target = $region48
        $region47: #{tpu_custom_call.1} parent=31 // pred_region
          %s881 = smul.u32 16, %s23
        $region48: #{tpu_custom_call.1} parent=31 // pred_fallthru
          _
      $region32: #{tpu_custom_call.1} parent=5 // pred_fallthru
        _
      %p882 = scmp.le.s32.totalorder 2, %s14
      // Predicated region
      $region49: #{tpu_custom_call.1} parent=5 // pred_check
        %p883 = pneg %p882
      $region50: #{tpu_custom_call.1} parent=5 // pred_check_branch
        %885 = sbr.rel (%p883) target = $region52
      $region51: #{tpu_custom_call.1} parent=5 // pred_region
        %s886 = ssub.s32 %s14, 2
        // Predicated region
        $region53: #{tpu_custom_call.1} parent=51 // pred_check
          %p887 = pneg %p135
        $region54: #{tpu_custom_call.1} parent=51 // pred_check_branch
          %889 = sbr.rel (%p887) target = $region56
        $region55: #{tpu_custom_call.1} parent=51 // pred_region
          %s890 = sand.u32 %s120, 1
          %s891 = scalar_lea.sflag [#allocation5], %s890
          %s892 = sand.u32 %s120, 1
          %s893 = smul.addr %s892, 128
          %s894 = scalar_lea.vmem [#allocation4], %s893
          %895 = dma.done %s891, 2048
        $region56: #{tpu_custom_call.1} parent=51 // pred_fallthru
          _
        // Predicated region
        $region57: #{tpu_custom_call.1} parent=51 // pred_check
          %p896 = pneg %p161
        $region58: #{tpu_custom_call.1} parent=51 // pred_check_branch
          %898 = sbr.rel (%p896) target = $region60
        $region59: #{tpu_custom_call.1} parent=51 // pred_region
          %s899 = smul.u32 16, %s25
          %p900 = scmp.lt.s32.totalorder %s899, 31
          %s901 = scalar_select %p900, %s899, 31
          %s902 = smul.addr %s901, 8
          %s903 = scalar_lea.vmem %s4, %s902
        $region60: #{tpu_custom_call.1} parent=51 // pred_fallthru
          _
      $region52: #{tpu_custom_call.1} parent=5 // pred_fallthru
        _
    $region6: #{tpu_custom_call.1} parent=1 // loop_footer
      %s18 = sadd.s32 1, %s14
    $region7: #{tpu_custom_call.1} parent=1 // loop_footer_branch
      %13 = sbr.rel target = $region3
    $region8: #{tpu_custom_call.1} parent=1 // loop_exit
      _
    %904 = vsyncpa [#allocation5], 1
    %s905 = scalar_lea.sflag [#allocation5], 1
    %906 = vsyncpa %s905, 1

</llo_original>
